<compile_context>
chip_gen: v7x
topology: tpu7x:2x2x1
jax: 0.10.0
libtpu: 0.0.40
codegen_flags: <defaults>
</compile_context>

<pallas_src>
import functools

import jax
import jax.numpy as jnp
from jax import lax
from jax.experimental import pallas as pl
from jax.experimental.pallas import tpu as pltpu

INPUT_DIM = 784
OUTPUT_DIM = 10
OUT_ROWS = 16  # OUTPUT_DIM padded up to a sublane-friendly 16 rows


def _round_up(x, m):
    return ((x + m - 1) // m) * m


def linear_kernel(x_ref, wt_ref, b_ref, o_ref):
    # x_ref : (tb, 784) f32   -- cast to bf16 on the VPU, hidden under DMA
    # wt_ref: (16, 784) bf16  -- resident padded W^T
    # b_ref : (16, 1)  f32    -- resident padded bias (lane-broadcast)
    # o_ref : (16, tb) f32    -- transposed output: batch on the lane axis
    x = x_ref[...].astype(jnp.bfloat16)
    acc = lax.dot_general(
        wt_ref[...], x,
        dimension_numbers=(((1,), (1,)), ((), ())),   # contract K=784 of both
        preferred_element_type=jnp.float32)
    o_ref[...] = acc + b_ref[...]


@functools.partial(jax.jit, static_argnames=("tile_b",))
def logistic_regression_forward(x, w, b, *, tile_b=2048):
    """Forward pass of LogisticRegression.

    x: [B, 784] float, w: [784, 10] float (pre-transposed vs. PyTorch's
    [out, in] layout), b: [10] or [1, 10].  Returns [B, 10] float32.
    """
    B = x.shape[0]
    x = x.astype(jnp.float32)

    # Tiny resident operands: padded W^T (bf16) and padded bias (f32).
    wt = jnp.zeros((OUT_ROWS, INPUT_DIM), jnp.bfloat16)
    wt = wt.at[:OUTPUT_DIM].set(jnp.transpose(w).astype(jnp.bfloat16))
    bias = jnp.zeros((OUT_ROWS, 1), jnp.float32)
    bias = bias.at[:OUTPUT_DIM, 0].set(
        jnp.reshape(b, (OUTPUT_DIM,)).astype(jnp.float32))

    # Batch tile selection (no batch padding; partial last block is clipped).
    #  - small B: single tile equal to the full batch (block == full dims).
    #  - larger B: tile is a multiple of 128 (output lane constraint), capped
    #    at tile_b, and chosen so there are >= 2 tiles (v7x megacore).
    if B >= 256:
        tb = min(tile_b, _round_up(pl.cdiv(B, 2), 128))
        tb = max(tb, 128)
    else:
        tb = B
    n_tiles = pl.cdiv(B, tb)

    cost = pl.CostEstimate(
        flops=2 * B * INPUT_DIM * OUT_ROWS,
        transcendentals=0,
        bytes_accessed=(B * INPUT_DIM * 4          # f32 activations (read once)
                        + OUT_ROWS * INPUT_DIM * 2  # bf16 weights (resident)
                        + OUT_ROWS * 4              # f32 bias
                        + OUT_ROWS * B * 4),        # f32 transposed output
    )

    out_t = pl.pallas_call(
        linear_kernel,
        out_shape=jax.ShapeDtypeStruct((OUT_ROWS, B), jnp.float32),
        grid_spec=pltpu.PrefetchScalarGridSpec(
            num_scalar_prefetch=0,
            grid=(n_tiles,),
            in_specs=[
                pl.BlockSpec((tb, INPUT_DIM), lambda i: (i, 0)),        # x tile
                pl.BlockSpec((OUT_ROWS, INPUT_DIM), lambda i: (0, 0)),  # W^T resident
                pl.BlockSpec((OUT_ROWS, 1), lambda i: (0, 0)),          # bias resident
            ],
            out_specs=pl.BlockSpec((OUT_ROWS, tb), lambda i: (0, i)),
        ),
        compiler_params=pltpu.CompilerParams(
            # Batch tiles are independent -> shard across TensorCores (v7x).
            dimension_semantics=("parallel",),
        ),
        cost_estimate=cost,
    )(x, wt, bias)

    # Contiguous de-pad: first 10 rows, then transpose back to (B, 10).
    return jnp.transpose(out_t[:OUTPUT_DIM, :])


if __name__ == "__main__":
    key = jax.random.PRNGKey(0)
    kx, kw, kb = jax.random.split(key, 3)

    # Deterministic parameter init (mimics torch.nn.Linear uniform(+-1/sqrt(in)))
    bound = 1.0 / (INPUT_DIM ** 0.5)
    w = jax.random.uniform(kw, (INPUT_DIM, OUTPUT_DIM), dtype=jnp.float32,
                           minval=-bound, maxval=bound)
    b = jax.random.uniform(kb, (OUTPUT_DIM,), dtype=jnp.float32,
                           minval=-bound, maxval=bound)

    # Exercise both the single-tile path (B=8) and the multi-tile path with a
    # partial last block (B=300 -> 2 tiles of 256, second one clipped).
    for batch in (8, 300):
        x = jax.random.normal(kx, (batch, INPUT_DIM), dtype=jnp.float32)

        out = logistic_regression_forward(x, w, b)
        jax.block_until_ready(out)

        # Reference 1: same bf16-input / f32-accumulation math as the kernel.
        ref_bf16 = jnp.dot(x.astype(jnp.bfloat16), w.astype(jnp.bfloat16),
                           preferred_element_type=jnp.float32) + b[None, :]
        # Reference 2: full f32 math (looser tolerance due to bf16 input cast).
        ref_f32 = x @ w + b[None, :]

        assert out.shape == (batch, OUTPUT_DIM)
        assert jnp.allclose(out, ref_bf16, atol=1e-4, rtol=1e-4), \
            f"mismatch vs bf16 reference (batch={batch})"
        assert jnp.allclose(out, ref_f32, atol=5e-2, rtol=5e-2), \
            f"mismatch vs f32 reference (batch={batch})"

    print("KERNEL_OK")
</pallas_src>

<mosaic_0001>
module attributes {stable_mosaic.version = 11 : i64} {
  func.func @linear_kernel(%arg0: i32, %arg1: memref<8x784xf32, #tpu.memory_space<vmem>>, %arg2: memref<16x784xbf16, #tpu.memory_space<vmem>>, %arg3: memref<16x1xf32, #tpu.memory_space<vmem>>, %arg4: memref<16x8xf32, #tpu.memory_space<vmem>>) attributes {dimension_semantics = [#tpu.dimension_semantics<parallel>], iteration_bounds = array<i64: 1>, scalar_prefetch = 0 : i64, scratch_operands = 0 : i64, tpu.core_type = #tpu.core_type<tc>, window_params = [{transform_indices = @transform_0, window_bounds = array<i64: 8, 784>}, {pipeline_mode = #tpu.pipeline_mode<synchronous>, transform_indices = @transform_1, window_bounds = array<i64: 16, 784>}, {pipeline_mode = #tpu.pipeline_mode<synchronous>, transform_indices = @transform_2, window_bounds = array<i64: 16, 1>}, {transform_indices = @transform_3, window_bounds = array<i64: 16, 8>}]} {
    %c0 = arith.constant 0 : index
    %c0_0 = arith.constant 0 : index
    %0 = vector.load %arg1[%c0, %c0_0] : memref<8x784xf32, #tpu.memory_space<vmem>>, vector<8x784xf32>
    %1 = arith.truncf %0 : vector<8x784xf32> to vector<8x784xbf16>
    %c0_1 = arith.constant 0 : index
    %c0_2 = arith.constant 0 : index
    %2 = vector.load %arg2[%c0_1, %c0_2] : memref<16x784xbf16, #tpu.memory_space<vmem>>, vector<16x784xbf16>
    %cst = arith.constant dense<0.000000e+00> : vector<16x8xf32>
    %3 = tpu.matmul %2, %1, %cst {dimension_numbers = #tpu.dot_dimension_numbers<[1], [1], [0], [0], [0, 0, 1, 0], [], []>} : vector<16x784xbf16>, vector<8x784xbf16>, vector<16x8xf32> -> vector<16x8xf32>
    %c0_3 = arith.constant 0 : index
    %c0_4 = arith.constant 0 : index
    %4 = vector.load %arg3[%c0_3, %c0_4] : memref<16x1xf32, #tpu.memory_space<vmem>>, vector<16x1xf32>
    %5 = vector.broadcast %4 : vector<16x1xf32> to vector<16x8xf32>
    %6 = arith.addf %3, %5 : vector<16x8xf32>
    %c0_5 = arith.constant 0 : index
    %c0_6 = arith.constant 0 : index
    %7 = vector.load %arg4[%c0_5, %c0_6] : memref<16x8xf32, #tpu.memory_space<vmem>>, vector<16x8xf32>
    tpu.vector_store %arg4[%c0_5, %c0_6], %6 {strides = array<i32>} : memref<16x8xf32, #tpu.memory_space<vmem>>, vector<16x8xf32>,
    return
  }
  func.func @transform_0(%arg0: i32) -> (i32, i32) {
    %c0_i32 = arith.constant 0 : i32
    %c0_i32_0 = arith.constant 0 : i32
    return %arg0, %c0_i32 : i32, i32
  }
  func.func @transform_1(%arg0: i32) -> (i32, i32) {
    %c0_i32 = arith.constant 0 : i32
    %c0_i32_0 = arith.constant 0 : i32
    %c0_i32_1 = arith.constant 0 : i32
    return %c0_i32, %c0_i32_0 : i32, i32
  }
  func.func @transform_2(%arg0: i32) -> (i32, i32) {
    %c0_i32 = arith.constant 0 : i32
    %c0_i32_0 = arith.constant 0 : i32
    %c0_i32_1 = arith.constant 0 : i32
    return %c0_i32, %c0_i32_0 : i32, i32
  }
  func.func @transform_3(%arg0: i32) -> (i32, i32) {
    %c0_i32 = arith.constant 0 : i32
    %c0_i32_0 = arith.constant 0 : i32
    return %c0_i32, %arg0 : i32, i32
  }
}

</mosaic_0001>

<llo_original>
// kernel: logistic_regression_forward.1
$region0: #{logistic_regression_forward.1}
  #allocation0 [shape = 'u32[]', space=smem, size = 0x4, offset = 0x4, fixed_abs, tag = 'smem constant byte address 0x4 - core index']
  #allocation1 [shape = 'u32[144,128]{1,0:T(1,128)}', space=vmem, size = 0x12000, scoped, tag = 'internal scratch']
  %s0 = inlined_call_operand.vmem [shape: f32[8,784], index: 0, kind: input, shape index: {}]
  %s1 = inlined_call_operand.vmem [shape: bf16[16,784], index: 1, kind: input, shape index: {}]
  %s2 = inlined_call_operand.vmem [shape: f32[16,1], index: 2, kind: input, shape index: {}]
  %s3 = inlined_call_operand.vmem [shape: f32[16,8], index: 3, kind: output, shape index: {}]
  %s4 = sld [smem:[#allocation0]]
  $region22: #{logistic_regression_forward.1} parent=0
    _
  %s6 = ssub.s32 1, %s4
  %s7 = scalar_select 0, %s6, %s4
  // Predicated region
  $region2: #{logistic_regression_forward.1} parent=0 // pred_check
    _
  $region3: #{logistic_regression_forward.1} parent=0 // pred_check_branch
    %9 = sbr.rel (0) target = $region5
  $region4: #{logistic_regression_forward.1} parent=0 // pred_region
    _
  $region5: #{logistic_regression_forward.1} parent=0 // pred_fallthru
    _
  // Predicated region
  $region6: #{logistic_regression_forward.1} parent=0 // pred_check
    _
  $region7: #{logistic_regression_forward.1} parent=0 // pred_check_branch
    %11 = sbr.rel (0) target = $region9
  $region8: #{logistic_regression_forward.1} parent=0 // pred_region
    _
  $region9: #{logistic_regression_forward.1} parent=0 // pred_fallthru
    _
  // Predicated region
  $region10: #{logistic_regression_forward.1} parent=0 // pred_check
    _
  $region11: #{logistic_regression_forward.1} parent=0 // pred_check_branch
    %13 = sbr.rel (0) target = $region13
  $region12: #{logistic_regression_forward.1} parent=0 // pred_region
    _
  $region13: #{logistic_regression_forward.1} parent=0 // pred_fallthru
    _
  %v15 = vld [vmem:[%s0] sm:$0xff]
  %v16 = vld [vmem:[%s0 + $0x8] sm:$0xff]
  %v17 = vld [vmem:[%s0 + $0x10] sm:$0xff]
  %v18 = vld [vmem:[%s0 + $0x18] sm:$0xff]
  %v19 = vld [vmem:[%s0 + $0x20] sm:$0xff]
  %v20 = vld [vmem:[%s0 + $0x28] sm:$0xff]
  %v21 = vld [vmem:[%s0 + $0x30] sm:$0xff]
  %v22 = vpack.c.bf16 %v15, %v15
  %v23 = vpack.c.bf16 %v16, %v16
  %v24 = vpack.c.bf16 %v17, %v17
  %v25 = vpack.c.bf16 %v18, %v18
  %v26 = vpack.c.bf16 %v19, %v19
  %v27 = vpack.c.bf16 %v20, %v20
  %v28 = vpack.c.bf16 %v21, %v21
  %v29 = vld [vmem:[%s1] sm:$0xff]
  %v30 = vld [vmem:[%s1 + $0x8] sm:$0xff]
  %v31 = vld [vmem:[%s1 + $0x10] sm:$0xff]
  %v32 = vld [vmem:[%s1 + $0x18] sm:$0xf]
  %v33 = vld [vmem:[%s1 + $0x1c] sm:$0xff]
  %v34 = vld [vmem:[%s1 + $0x24] sm:$0xff]
  %v35 = vld [vmem:[%s1 + $0x2c] sm:$0xff]
  %v36 = vld [vmem:[%s1 + $0x34] sm:$0xf]
  %v37 = vld [vmem:[%s2] sm:$0xff]
  %v38 = vld [vmem:[%s2 + $0x8] sm:$0xff]
  %40 = vset.pattern.permute.xlu0 0
  %41 = vperm.xlu0 %40, %v37
  %v42 = vpop.permute.xlu0 %41
  %45 = vset.pattern.permute.xlu0 0
  %46 = vperm.xlu0 %45, %v38
  %v47 = vpop.permute.xlu0 %46
  %v57 = vunpack.c.l.b16 %v29
  %v58 = vunpack.c.h.b16 %v29
  %v59 = vunpack.c.l.b16 %v30
  %v60 = vunpack.c.h.b16 %v30
  %v61 = vunpack.c.l.b16 %v31
  %v62 = vunpack.c.h.b16 %v31
  %v63 = vunpack.c.l.b16 %v32
  %v64 = vunpack.c.l.b16 %v33
  %v65 = vunpack.c.h.b16 %v33
  %v66 = vunpack.c.l.b16 %v34
  %v67 = vunpack.c.h.b16 %v34
  %v68 = vunpack.c.l.b16 %v35
  %v69 = vunpack.c.h.b16 %v35
  %v70 = vunpack.c.l.b16 %v36
  %v71 = vpack.c.b16 %v64, %v57
  %v72 = vpack.c.b16 %v65, %v58
  %v73 = vpack.c.b16 %v66, %v59
  %v74 = vpack.c.b16 %v67, %v60
  %v75 = vpack.c.b16 %v68, %v61
  %v76 = vpack.c.b16 %v69, %v62
  %v77 = vpack.c.b16 %v70, %v63
  %vm84 = vcmask 130048
  %v86 = vsel %vm84, %v77, 0
  %v89 = vsel %vm84, %v28, 0
  %91 = vmatprep.subr.bf16.mxu0 %v23
  %92 = vmatpush1.bf16.xpose.msra.mxu0 %v22
  %93 = vmatprep.subr.bf16.mxu0 0
  %94 = vmatpush1.bf16.xpose.msra.mxu0 0
  %95 = vmatprep.subr.bf16.mxu0 0
  %96 = vmatpush1.bf16.xpose.msra.mxu0 0
  %97 = vmatprep.subr.bf16.mxu0 0
  %98 = vmatpush1.bf16.xpose.msra.mxu0 0
  %99 = vmatprep.subr.bf16.mxu0 0
  %100 = vmatpush1.bf16.xpose.msra.mxu0 0
  %101 = vmatprep.subr.bf16.mxu0 0
  %102 = vmatpush1.bf16.xpose.msra.mxu0 0
  %103 = vmatprep.subr.bf16.mxu0 0
  %104 = vmatpush1.bf16.xpose.msra.mxu0 0
  %105 = vmatprep.subr.bf16.mxu0 0
  %106 = vmatpush1.bf16.xpose.msra.mxu0 0
  %107 = vmatprep.subr.bf16.mxu0 0
  %108 = vmatpush1.bf16.xpose.msra.mxu0 0
  %109 = vmatprep.subr.bf16.mxu0 0
  %110 = vmatpush1.bf16.xpose.msra.mxu0 0
  %111 = vmatprep.subr.bf16.mxu0 0
  %112 = vmatpush1.bf16.xpose.msra.mxu0 0
  %113 = vmatprep.subr.bf16.mxu0 0
  %114 = vmatpush1.bf16.xpose.msra.mxu0 0
  %115 = vmatprep.subr.bf16.mxu0 0
  %116 = vmatpush1.bf16.xpose.msra.mxu0 0
  %117 = vmatprep.subr.bf16.mxu0 0
  %118 = vmatpush1.bf16.xpose.msra.mxu0 0
  %119 = vmatprep.subr.bf16.mxu0 0
  %120 = vmatpush1.bf16.xpose.msra.mxu0 0
  %121 = vmatprep.subr.bf16.mxu0 0
  %122 = vmatpush1.bf16.xpose.msra.mxu0 0
  %123 = vmatprep.mubr.bf16.mxu0 %v72
  %124 = vmatmul.mubr.bf16.gmra.mrb[0].mxu0 %v71
  %v125 = vpop.f32.mrb[0].mxu0
  %v126 = vadd.f32 %v42, %v125
  %v127 = vpop.f32.mrb[0].mxu0
  %v128 = vpop.f32.mrb[0].mxu0
  %v129 = vadd.f32 %v47, %v128
  %v130 = vpop.f32.mrb[0].mxu0
  %131 = vdwg.mxu0
  %132 = vmatprep.subr.bf16.mxu0 %v25
  %133 = vmatpush1.bf16.xpose.msra.mxu0 %v24
  %134 = vmatprep.subr.bf16.mxu0 0
  %135 = vmatpush1.bf16.xpose.msra.mxu0 0
  %136 = vmatprep.subr.bf16.mxu0 0
  %137 = vmatpush1.bf16.xpose.msra.mxu0 0
  %138 = vmatprep.subr.bf16.mxu0 0
  %139 = vmatpush1.bf16.xpose.msra.mxu0 0
  %140 = vmatprep.subr.bf16.mxu0 0
  %141 = vmatpush1.bf16.xpose.msra.mxu0 0
  %142 = vmatprep.subr.bf16.mxu0 0
  %143 = vmatpush1.bf16.xpose.msra.mxu0 0
  %144 = vmatprep.subr.bf16.mxu0 0
  %145 = vmatpush1.bf16.xpose.msra.mxu0 0
  %146 = vmatprep.subr.bf16.mxu0 0
  %147 = vmatpush1.bf16.xpose.msra.mxu0 0
  %148 = vmatprep.subr.bf16.mxu0 0
  %149 = vmatpush1.bf16.xpose.msra.mxu0 0
  %150 = vmatprep.subr.bf16.mxu0 0
  %151 = vmatpush1.bf16.xpose.msra.mxu0 0
  %152 = vmatprep.subr.bf16.mxu0 0
  %153 = vmatpush1.bf16.xpose.msra.mxu0 0
  %154 = vmatprep.subr.bf16.mxu0 0
  %155 = vmatpush1.bf16.xpose.msra.mxu0 0
  %156 = vmatprep.subr.bf16.mxu0 0
  %157 = vmatpush1.bf16.xpose.msra.mxu0 0
  %158 = vmatprep.subr.bf16.mxu0 0
  %159 = vmatpush1.bf16.xpose.msra.mxu0 0
  %160 = vmatprep.subr.bf16.mxu0 0
  %161 = vmatpush1.bf16.xpose.msra.mxu0 0
  %162 = vmatprep.subr.bf16.mxu0 0
  %163 = vmatpush1.bf16.xpose.msra.mxu0 0
  %164 = vmatprep.mubr.bf16.mxu0 %v74
  %165 = vmatmul.mubr.bf16.gmra.mrb[0].mxu0 %v73
  %v166 = vpop.f32.mrb[0].mxu0
  %v167 = vadd.f32 %v126, %v166
  %v168 = vpop.f32.mrb[0].mxu0
  %v169 = vpop.f32.mrb[0].mxu0
  %v170 = vadd.f32 %v129, %v169
  %v171 = vpop.f32.mrb[0].mxu0
  %172 = vdwg.mxu0
  %173 = vmatprep.subr.bf16.mxu0 %v27
  %174 = vmatpush1.bf16.xpose.msra.mxu0 %v26
  %175 = vmatprep.subr.bf16.mxu0 0
  %176 = vmatpush1.bf16.xpose.msra.mxu0 0
  %177 = vmatprep.subr.bf16.mxu0 0
  %178 = vmatpush1.bf16.xpose.msra.mxu0 0
  %179 = vmatprep.subr.bf16.mxu0 0
  %180 = vmatpush1.bf16.xpose.msra.mxu0 0
  %181 = vmatprep.subr.bf16.mxu0 0
  %182 = vmatpush1.bf16.xpose.msra.mxu0 0
  %183 = vmatprep.subr.bf16.mxu0 0
  %184 = vmatpush1.bf16.xpose.msra.mxu0 0
  %185 = vmatprep.subr.bf16.mxu0 0
  %186 = vmatpush1.bf16.xpose.msra.mxu0 0
  %187 = vmatprep.subr.bf16.mxu0 0
  %188 = vmatpush1.bf16.xpose.msra.mxu0 0
  %189 = vmatprep.subr.bf16.mxu0 0
  %190 = vmatpush1.bf16.xpose.msra.mxu0 0
  %191 = vmatprep.subr.bf16.mxu0 0
  %192 = vmatpush1.bf16.xpose.msra.mxu0 0
  %193 = vmatprep.subr.bf16.mxu0 0
  %194 = vmatpush1.bf16.xpose.msra.mxu0 0
  %195 = vmatprep.subr.bf16.mxu0 0
  %196 = vmatpush1.bf16.xpose.msra.mxu0 0
  %197 = vmatprep.subr.bf16.mxu0 0
  %198 = vmatpush1.bf16.xpose.msra.mxu0 0
  %199 = vmatprep.subr.bf16.mxu0 0
  %200 = vmatpush1.bf16.xpose.msra.mxu0 0
  %201 = vmatprep.subr.bf16.mxu0 0
  %202 = vmatpush1.bf16.xpose.msra.mxu0 0
  %203 = vmatprep.subr.bf16.mxu0 0
  %204 = vmatpush1.bf16.xpose.msra.mxu0 0
  %205 = vmatprep.mubr.bf16.mxu0 %v76
  %206 = vmatmul.mubr.bf16.gmra.mrb[0].mxu0 %v75
  %v207 = vpop.f32.mrb[0].mxu0
  %v208 = vadd.f32 %v167, %v207
  %v209 = vpop.f32.mrb[0].mxu0
  %v210 = vpop.f32.mrb[0].mxu0
  %v211 = vadd.f32 %v170, %v210
  %v212 = vpop.f32.mrb[0].mxu0
  %213 = vdwg.mxu0
  %214 = vmatprep.subr.bf16.mxu0 0
  %215 = vmatpush1.bf16.xpose.msra.mxu0 %v89
  %216 = vmatprep.subr.bf16.mxu0 0
  %217 = vmatpush1.bf16.xpose.msra.mxu0 0
  %218 = vmatprep.subr.bf16.mxu0 0
  %219 = vmatpush1.bf16.xpose.msra.mxu0 0
  %220 = vmatprep.subr.bf16.mxu0 0
  %221 = vmatpush1.bf16.xpose.msra.mxu0 0
  %222 = vmatprep.subr.bf16.mxu0 0
  %223 = vmatpush1.bf16.xpose.msra.mxu0 0
  %224 = vmatprep.subr.bf16.mxu0 0
  %225 = vmatpush1.bf16.xpose.msra.mxu0 0
  %226 = vmatprep.subr.bf16.mxu0 0
  %227 = vmatpush1.bf16.xpose.msra.mxu0 0
  %228 = vmatprep.subr.bf16.mxu0 0
  %229 = vmatpush1.bf16.xpose.msra.mxu0 0
  %230 = vmatprep.subr.bf16.mxu0 0
  %231 = vmatpush1.bf16.xpose.msra.mxu0 0
  %232 = vmatprep.subr.bf16.mxu0 0
  %233 = vmatpush1.bf16.xpose.msra.mxu0 0
  %234 = vmatprep.subr.bf16.mxu0 0
  %235 = vmatpush1.bf16.xpose.msra.mxu0 0
  %236 = vmatprep.subr.bf16.mxu0 0
  %237 = vmatpush1.bf16.xpose.msra.mxu0 0
  %238 = vmatprep.subr.bf16.mxu0 0
  %239 = vmatpush1.bf16.xpose.msra.mxu0 0
  %240 = vmatprep.subr.bf16.mxu0 0
  %241 = vmatpush1.bf16.xpose.msra.mxu0 0
  %242 = vmatprep.subr.bf16.mxu0 0
  %243 = vmatpush1.bf16.xpose.msra.mxu0 0
  %244 = vmatprep.subr.bf16.mxu0 0
  %245 = vmatpush1.bf16.xpose.msra.mxu0 0
  %246 = vmatprep.mubr.bf16.mxu0 0
  %247 = vmatmul.mubr.bf16.gmra.mrb[0].mxu0 %v86
  %v248 = vpop.f32.mrb[0].mxu0
  %v249 = vadd.f32 %v208, %v248
  %v250 = vpop.f32.mrb[0].mxu0
  %v251 = vpop.f32.mrb[0].mxu0
  %v252 = vadd.f32 %v211, %v251
  %v253 = vpop.f32.mrb[0].mxu0
  %254 = vdwg.mxu0
  %vm255 = vcmask 64512
  %256 = vst.msk [vmem:[%s3] sm:$0xff] %vm255, %v249
  %257 = vst.msk [vmem:[%s3 + $0x8] sm:$0xff] %vm255, %v252
  // Predicated region
  $region14: #{logistic_regression_forward.1} parent=0 // pred_check
    _
  $region15: #{logistic_regression_forward.1} parent=0 // pred_check_branch
    %259 = sbr.rel (0) target = $region17
  $region16: #{logistic_regression_forward.1} parent=0 // pred_region
    _
  $region17: #{logistic_regression_forward.1} parent=0 // pred_fallthru
    _
  // Predicated region
  $region18: #{logistic_regression_forward.1} parent=0 // pred_check
    _
  $region19: #{logistic_regression_forward.1} parent=0 // pred_check_branch
    %261 = sbr.rel (0) target = $region21
  $region20: #{logistic_regression_forward.1} parent=0 // pred_region
    _
  $region21: #{logistic_regression_forward.1} parent=0 // pred_fallthru
    _

</llo_original>
